<compile_context>
chip_gen: v7x
topology: tpu7x:2x2x1
jax: 0.10.0
libtpu: 0.0.40
codegen_flags: <defaults>
</compile_context>

<pallas_src>
import jax
import jax.numpy as jnp
from jax.experimental import pallas as pl
from jax.experimental.pallas import tpu as pltpu


def _round_up(n, m):
    return ((n + m - 1) // m) * m


def _tpu_profile():
    """Generation-aware tuning knobs (VMEM capacity, token-tile target, core count)."""
    kind = ""
    try:
        kind = jax.devices()[0].device_kind.lower()
    except Exception:
        pass
    if "v7" in kind:
        # v7x: 64 MiB VMEM/TC, ~3.2 TB/s HBM -> compute-bound knee ~ tm 384-512; 2 TCs.
        return {"vmem_cap": 64 << 20, "tm_target": 512, "cores": 2}
    if "v6" in kind or "v5" in kind or "v4" in kind:
        # v5e/v6e: 128 MiB VMEM, knee ~680 FLOP/weight-byte -> tm target 1024; 1 TC.
        return {"vmem_cap": 128 << 20, "tm_target": 1024, "cores": 1}
    # Unknown generation: conservative settings that are safe everywhere.
    return {"vmem_cap": 64 << 20, "tm_target": 512, "cores": 1}


def _pick_th(Hp, max_th=1024):
    """Largest multiple of 128 that divides Hp, capped at max_th (Hp is a 128-multiple)."""
    best = 128
    t = 128
    while t <= min(Hp, max_th):
        if Hp % t == 0:
            best = t
        t += 128
    return best


# ----------------------------- kernels ---------------------------------------------


def _expert_kernel_acc(x_ref, w_up_ref, w_dn_ref, o_ref, acc_ref):
    # x_ref    : [tm, Dp] bf16   (token tile)
    # w_up_ref : [Dp, th] bf16   (W_up^T, pre-transposed -> NN matmul, no XLU transpose)
    # w_dn_ref : [th, td] bf16   (W_down^T, pre-transposed)
    # o_ref    : [tm, td] bf16
    # acc_ref  : [tm, td] f32    (resident across the hidden reduction axis k)
    k = pl.program_id(2)

    @pl.when(k == 0)
    def _():
        acc_ref[...] = jnp.zeros_like(acc_ref)

    h = jnp.dot(x_ref[...], w_up_ref[...], preferred_element_type=jnp.float32)
    # SiLU in f32 (EUP); single cast to bf16 for the down matmul (parity note: PyTorch
    # rounds the up_proj output to bf16 before SiLU; deviation covered by tolerance).
    h = h * jax.nn.sigmoid(h)
    acc_ref[...] += jnp.dot(
        h.astype(jnp.bfloat16), w_dn_ref[...], preferred_element_type=jnp.float32
    )

    @pl.when(k == pl.num_programs(2) - 1)
    def _():
        o_ref[...] = acc_ref[...].astype(o_ref.dtype)


def _expert_kernel_single(x_ref, w_up_ref, w_dn_ref, o_ref):
    # Specialization for nh == 1 (hidden fits one tile): no f32 accumulator scratch,
    # no zero-init / read-modify-write traffic.
    h = jnp.dot(x_ref[...], w_up_ref[...], preferred_element_type=jnp.float32)
    h = h * jax.nn.sigmoid(h)
    o_ref[...] = jnp.dot(
        h.astype(jnp.bfloat16), w_dn_ref[...], preferred_element_type=jnp.float32
    ).astype(o_ref.dtype)


# ----------------------------- wrapper ----------------------------------------------


def prepare_expert_weights(w_up, w_down):
    """One-time (weight-load / init-time) transpose + pad of PyTorch-layout weights.

    w_up   : [hidden, in_dim]  ->  w_up_t   : [Dp, Hp]   (x @ w_up_t   == x @ w_up.T)
    w_down : [in_dim, hidden]  ->  w_down_t : [Hp, Dp]   (h @ w_down_t == h @ w_down.T)

    Hoisted out of the per-call path so the full weight matrices are not rewritten
    through HBM on every forward (pure overhead for decode-sized token counts).
    """
    hidden, in_dim = w_up.shape
    assert w_down.shape == (in_dim, hidden)
    Dp = _round_up(in_dim, 128)
    Hp = _round_up(hidden, 128)
    w_up_t = jnp.pad(jnp.swapaxes(w_up, 0, 1), ((0, Dp - in_dim), (0, Hp - hidden)))
    w_down_t = jnp.pad(jnp.swapaxes(w_down, 0, 1), ((0, Hp - hidden), (0, Dp - in_dim)))
    return w_up_t, w_down_t


def expert_mlp(x, w_up_t, w_down_t):
    """y = down_proj(SiLU(up_proj(x))) for one expert (matches ExpertMLP.forward).

    x        : [T, in_dim] bf16 (unpadded)
    w_up_t   : [Dp, Hp]    bf16 (from prepare_expert_weights)
    w_down_t : [Hp, Dp]    bf16
    """
    T, in_dim = x.shape
    Dp, Hp = w_up_t.shape
    assert w_down_t.shape == (Hp, Dp) and Dp >= in_dim

    prof = _tpu_profile()
    cap = int(prof["vmem_cap"] * 0.85)  # ~108 MiB on v5e/v6e, ~54 MiB on v7x
    budget = cap - (4 << 20)

    # --- tile selection -------------------------------------------------------------
    th = _pick_th(Hp)
    tm = max(8, min(prof["tm_target"], _round_up(T, 8)))

    def footprint(tm_, th_, td_):
        # double-buffered bf16 pipeline blocks + (worst case) f32 accumulator
        return 2 * 2 * (tm_ * Dp + Dp * th_ + th_ * td_ + tm_ * td_) + 4 * tm_ * td_

    while footprint(tm, th, Dp) > budget and tm > 128:
        tm = max(128, tm // 2)
    while footprint(tm, th, Dp) > budget and th > 128:
        th = _pick_th(Hp, max_th=th - 128)

    Tp = _round_up(T, tm)
    nh = Hp // th

    # Small-batch / decode case on multi-TensorCore chips (v7x): split the output-
    # feature dim into a second "parallel" axis so core 1 has work.  Only when the
    # hidden dim fits a single tile (nh == 1), so neither weight matrix is re-streamed.
    ndp = 1
    if prof["cores"] > 1 and nh == 1 and Tp // tm == 1 and Dp % (128 * prof["cores"]) == 0:
        ndp = prof["cores"]
    td = Dp // ndp

    # Always set the scoped-VMEM limit explicitly (v5e default is only 16 MiB).
    vmem_limit = int(min(max(footprint(tm, th, td) + (8 << 20), 16 << 20), cap))

    # --- pad activations (cheap: proportional to token count, not weights) -----------
    x_p = jnp.pad(x, ((0, Tp - T), (0, Dp - in_dim)))

    grid = (Tp // tm, ndp, nh)

    in_specs = [
        pl.BlockSpec((tm, Dp), lambda i, j, k: (i, 0)),  # x token tile
        pl.BlockSpec((Dp, th), lambda i, j, k: (0, k)),  # W_up^T hidden tile
        pl.BlockSpec((th, td), lambda i, j, k: (k, j)),  # W_down^T (hidden, out) tile
    ]
    out_specs = pl.BlockSpec((tm, td), lambda i, j, k: (i, j))

    if nh > 1:
        kernel = _expert_kernel_acc
        scratch = [pltpu.VMEM((tm, td), jnp.float32)]
    else:
        kernel = _expert_kernel_single
        scratch = []

    # Honest traffic estimate: x read once, output written once, weights streamed once
    # per token tile.
    n_token_tiles = Tp // tm
    cost = pl.CostEstimate(
        flops=2 * Tp * Dp * Hp * (1 + ndp),
        transcendentals=Tp * Hp * ndp,
        bytes_accessed=2 * (2 * Tp * Dp + n_token_tiles * 2 * Dp * Hp),
    )

    out_p = pl.pallas_call(
        kernel,
        out_shape=jax.ShapeDtypeStruct((Tp, Dp), x.dtype),
        grid_spec=pltpu.PrefetchScalarGridSpec(
            num_scalar_prefetch=0,
            grid=grid,
            in_specs=in_specs,
            out_specs=out_specs,
            scratch_shapes=scratch,
        ),
        compiler_params=pltpu.CompilerParams(
            dimension_semantics=("parallel", "parallel", "arbitrary"),
            vmem_limit_bytes=vmem_limit,
        ),
        cost_estimate=cost,
    )(x_p, w_up_t, w_down_t)

    return out_p[:T, :in_dim]


def expert_mlp_ref(x, w_up, w_down):
    # Matches ExpertMLP.forward: down_proj(SiLU(up_proj(x))); gate_proj is unused there.
    h = jnp.dot(x.astype(jnp.float32), w_up.astype(jnp.float32).T)
    h = h * jax.nn.sigmoid(h)
    out = jnp.dot(h, w_down.astype(jnp.float32).T)
    return out.astype(jnp.bfloat16)


if __name__ == "__main__":
    # Small shapes consistent with the module: batch=2, seq=8, in_dim=32, hidden=64
    batch, seq, in_dim, hidden_dim = 2, 8, 32, 64

    key = jax.random.PRNGKey(0)
    kx, kg, ku, kd = jax.random.split(key, 4)

    x = jax.random.normal(kx, (batch, seq, in_dim), dtype=jnp.float32).astype(jnp.bfloat16)
    bound_up = 1.0 / (in_dim ** 0.5)
    bound_dn = 1.0 / (hidden_dim ** 0.5)
    # gate_proj exists in ExpertMLP.__init__ but is unused in forward(); created for parity only.
    w_gate = jax.random.uniform(kg, (hidden_dim, in_dim), minval=-bound_up,
                                maxval=bound_up).astype(jnp.bfloat16)
    w_up = jax.random.uniform(ku, (hidden_dim, in_dim), minval=-bound_up,
                              maxval=bound_up).astype(jnp.bfloat16)
    w_down = jax.random.uniform(kd, (in_dim, hidden_dim), minval=-bound_dn,
                                maxval=bound_dn).astype(jnp.bfloat16)

    # One-time weight preparation (transpose + pad), hoisted out of the forward path.
    w_up_t, w_down_t = prepare_expert_weights(w_up, w_down)

    x_flat = x.reshape(batch * seq, in_dim)
    out_flat = expert_mlp(x_flat, w_up_t, w_down_t)
    out = out_flat.reshape(batch, seq, in_dim)
    jax.block_until_ready(out)

    ref = expert_mlp_ref(x_flat, w_up, w_down).reshape(batch, seq, in_dim)
    assert out.shape == (batch, seq, in_dim)
    assert out.dtype == jnp.bfloat16
    err = jnp.max(jnp.abs(out.astype(jnp.float32) - ref.astype(jnp.float32)))
    assert float(err) < 1e-1, f"mismatch vs reference: {float(err)}"

    print("KERNEL_OK")
</pallas_src>

<mosaic_0001>
module attributes {stable_mosaic.version = 11 : i64} {
  func.func @_expert_kernel_single(%arg0: i32, %arg1: i32, %arg2: i32, %arg3: memref<16x128xbf16, #tpu.memory_space<vmem>>, %arg4: memref<128x128xbf16, #tpu.memory_space<vmem>>, %arg5: memref<128x128xbf16, #tpu.memory_space<vmem>>, %arg6: memref<16x128xbf16, #tpu.memory_space<vmem>>) attributes {dimension_semantics = [#tpu.dimension_semantics<parallel>, #tpu.dimension_semantics<parallel>, #tpu.dimension_semantics<arbitrary>], iteration_bounds = array<i64: 1, 1, 1>, scalar_prefetch = 0 : i64, scratch_operands = 0 : i64, tpu.core_type = #tpu.core_type<tc>, window_params = [{transform_indices = @transform_0, window_bounds = array<i64: 16, 128>}, {transform_indices = @transform_1, window_bounds = array<i64: 128, 128>}, {transform_indices = @transform_2, window_bounds = array<i64: 128, 128>}, {transform_indices = @transform_3, window_bounds = array<i64: 16, 128>}]} {
    %c0 = arith.constant 0 : index
    %c0_0 = arith.constant 0 : index
    %0 = vector.load %arg3[%c0, %c0_0] : memref<16x128xbf16, #tpu.memory_space<vmem>>, vector<16x128xbf16>
    %c0_1 = arith.constant 0 : index
    %c0_2 = arith.constant 0 : index
    %1 = vector.load %arg4[%c0_1, %c0_2] : memref<128x128xbf16, #tpu.memory_space<vmem>>, vector<128x128xbf16>
    %cst = arith.constant dense<0.000000e+00> : vector<16x128xf32>
    %2 = tpu.matmul %0, %1, %cst {dimension_numbers = #tpu.dot_dimension_numbers<[1], [0], [0], [1], [0, 0, 1, 1], [], []>} : vector<16x128xbf16>, vector<128x128xbf16>, vector<16x128xf32> -> vector<16x128xf32>
    %3 = arith.negf %2 : vector<16x128xf32>
    %4 = math.exp %3 : vector<16x128xf32>
    %cst_3 = arith.constant 1.000000e+00 : f32
    %5 = vector.broadcast %cst_3 : f32 to vector<16x128xf32>
    %6 = arith.addf %5, %4 : vector<16x128xf32>
    %7 = arith.divf %5, %6 : vector<16x128xf32>
    %8 = arith.mulf %2, %7 : vector<16x128xf32>
    %9 = arith.truncf %8 : vector<16x128xf32> to vector<16x128xbf16>
    %c0_4 = arith.constant 0 : index
    %c0_5 = arith.constant 0 : index
    %10 = vector.load %arg5[%c0_4, %c0_5] : memref<128x128xbf16, #tpu.memory_space<vmem>>, vector<128x128xbf16>
    %cst_6 = arith.constant dense<0.000000e+00> : vector<16x128xf32>
    %11 = tpu.matmul %9, %10, %cst_6 {dimension_numbers = #tpu.dot_dimension_numbers<[1], [0], [0], [1], [0, 0, 1, 1], [], []>} : vector<16x128xbf16>, vector<128x128xbf16>, vector<16x128xf32> -> vector<16x128xf32>
    %12 = arith.truncf %11 : vector<16x128xf32> to vector<16x128xbf16>
    %c0_7 = arith.constant 0 : index
    %c0_8 = arith.constant 0 : index
    %13 = vector.load %arg6[%c0_7, %c0_8] : memref<16x128xbf16, #tpu.memory_space<vmem>>, vector<16x128xbf16>
    tpu.vector_store %arg6[%c0_7, %c0_8], %12 {strides = array<i32>} : memref<16x128xbf16, #tpu.memory_space<vmem>>, vector<16x128xbf16>,
    return
  }
  func.func @transform_0(%arg0: i32, %arg1: i32, %arg2: i32) -> (i32, i32) {
    %c0_i32 = arith.constant 0 : i32
    %c0_i32_0 = arith.constant 0 : i32
    return %arg0, %c0_i32 : i32, i32
  }
  func.func @transform_1(%arg0: i32, %arg1: i32, %arg2: i32) -> (i32, i32) {
    %c0_i32 = arith.constant 0 : i32
    %c0_i32_0 = arith.constant 0 : i32
    return %c0_i32, %arg2 : i32, i32
  }
  func.func @transform_2(%arg0: i32, %arg1: i32, %arg2: i32) -> (i32, i32) {
    %c0_i32 = arith.constant 0 : i32
    return %arg2, %arg1 : i32, i32
  }
  func.func @transform_3(%arg0: i32, %arg1: i32, %arg2: i32) -> (i32, i32) {
    %c0_i32 = arith.constant 0 : i32
    return %arg0, %arg1 : i32, i32
  }
}

</mosaic_0001>

<llo_original>
// kernel: tpu_custom_call.1
$region0: #{tpu_custom_call.1}
  #allocation0 [shape = 'u32[]', space=smem, size = 0x4, offset = 0x4, fixed_abs, tag = 'smem constant byte address 0x4 - core index']
  #allocation1 [shape = 'u32[144,128]{1,0:T(1,128)}', space=vmem, size = 0x12000, scoped, tag = 'internal scratch']
  %s0 = inlined_call_operand.hbm [shape: bf16[16,128], index: 0, kind: input, shape index: {}]
  %s1 = inlined_call_operand.hbm [shape: bf16[128,128], index: 1, kind: input, shape index: {}]
  %s2 = inlined_call_operand.hbm [shape: bf16[128,128], index: 2, kind: input, shape index: {}]
  %s3 = inlined_call_operand.hbm [shape: bf16[16,128], index: 3, kind: output, shape index: {}]
  %s4 = sld [smem:[#allocation0]]
  $region34: #{tpu_custom_call.1} parent=0
    _
  %s6 = ssub.s32 1, %s4
  %s7 = scalar_select 0, %s6, %s4
  $region1: #{tpu_custom_call.1} parent=0
    #allocation2 [shape = 'u8[4096]{0}', space=vmem, size = 0x1000, scoped, tag = 'input window, operand 0, single buffered']
    #allocation3 [shape = 's32[1]{0}', space=sflag, size = 0x4, scoped, tag = 'scoped memory for tpu_custom_call.1']
    #allocation4 [shape = 's32[1]{0}', space=sflag, size = 0x4, scoped, tag = 'scoped memory for tpu_custom_call.1']
    #allocation5 [shape = 'u8[32768]{0}', space=vmem, size = 0x8000, scoped, tag = 'input window, operand 1, single buffered']
    #allocation6 [shape = 's32[1]{0}', space=sflag, size = 0x4, scoped, tag = 'scoped memory for tpu_custom_call.1']
    #allocation7 [shape = 'u8[32768]{0}', space=vmem, size = 0x8000, scoped, tag = 'input window, operand 2, single buffered']
    #allocation8 [shape = 'u8[4096]{0}', space=vmem, size = 0x1000, scoped, tag = 'output window, operand 0, single buffered']
    %8 = vsyncpa [#allocation3], 0
    %9 = vsyncpa [#allocation6], 0
    %10 = vsyncpa [#allocation4], 0
    // Predicated region
    $region2: #{tpu_custom_call.1} parent=1 // pred_check
      _
    $region3: #{tpu_custom_call.1} parent=1 // pred_check_branch
      %12 = sbr.rel (0) target = $region5
    $region4: #{tpu_custom_call.1} parent=1 // pred_region
      %s14 = ssub.s32 128, 128
      %15 = vsyncadd [#allocation3], %s14
      %s16 = sshll.u32 [#allocation2], 4
      %s17 = int_to_ptr.vmem [resolvable:$true] %s16
      %22 = dma.hbm_to_vmem [thread:$0]  %s0, 128, %s17, [#allocation3], 64, 64, 4
    $region5: #{tpu_custom_call.1} parent=1 // pred_fallthru
      _
    // Predicated region
    $region6: #{tpu_custom_call.1} parent=1 // pred_check
      _
    $region7: #{tpu_custom_call.1} parent=1 // pred_check_branch
      %24 = sbr.rel (0) target = $region9
    $region8: #{tpu_custom_call.1} parent=1 // pred_region
      %s26 = ssub.s32 1024, 1024
      %27 = vsyncadd [#allocation6], %s26
      %s28 = sshll.u32 [#allocation5], 4
      %s29 = int_to_ptr.vmem [resolvable:$true] %s28
      %34 = dma.hbm_to_vmem [thread:$0]  %s1, 1024, %s29, [#allocation6], 64, 64, 4
    $region9: #{tpu_custom_call.1} parent=1 // pred_fallthru
      _
    // Predicated region
    $region10: #{tpu_custom_call.1} parent=1 // pred_check
      _
    $region11: #{tpu_custom_call.1} parent=1 // pred_check_branch
      %36 = sbr.rel (0) target = $region13
    $region12: #{tpu_custom_call.1} parent=1 // pred_region
      %s38 = ssub.s32 1024, 1024
      %39 = vsyncadd [#allocation6], %s38
      %s40 = sshll.u32 [#allocation7], 4
      %s41 = int_to_ptr.vmem [resolvable:$true] %s40
      %46 = dma.hbm_to_vmem [thread:$0]  %s2, 1024, %s41, [#allocation6], 64, 64, 4
    $region13: #{tpu_custom_call.1} parent=1 // pred_fallthru
      _
    // Predicated region
    $region14: #{tpu_custom_call.1} parent=1 // pred_check
      _
    $region15: #{tpu_custom_call.1} parent=1 // pred_check_branch
      %48 = sbr.rel (0) target = $region17
    $region16: #{tpu_custom_call.1} parent=1 // pred_region
      %49 = dma.done [#allocation3], 128
    $region17: #{tpu_custom_call.1} parent=1 // pred_fallthru
      _
    // Predicated region
    $region18: #{tpu_custom_call.1} parent=1 // pred_check
      _
    $region19: #{tpu_custom_call.1} parent=1 // pred_check_branch
      %51 = sbr.rel (0) target = $region21
    $region20: #{tpu_custom_call.1} parent=1 // pred_region
      %52 = dma.done [#allocation6], 1024
    $region21: #{tpu_custom_call.1} parent=1 // pred_fallthru
      _
    // Predicated region
    $region22: #{tpu_custom_call.1} parent=1 // pred_check
      _
    $region23: #{tpu_custom_call.1} parent=1 // pred_check_branch
      %54 = sbr.rel (0) target = $region25
    $region24: #{tpu_custom_call.1} parent=1 // pred_region
      %55 = dma.done [#allocation6], 1024
    $region25: #{tpu_custom_call.1} parent=1 // pred_fallthru
      _
    %v57 = vld [vmem:[#allocation2] sm:$0xf]
    %v58 = vld [vmem:[#allocation2 + $0x4] sm:$0xf]
    %v59 = vld [vmem:[#allocation5] sm:$0xf]
    %v60 = vld [vmem:[#allocation5 + $0x4] sm:$0xf]
    %v61 = vld [vmem:[#allocation5 + $0x8] sm:$0xf]
    %v62 = vld [vmem:[#allocation5 + $0xc] sm:$0xf]
    %v63 = vld [vmem:[#allocation5 + $0x10] sm:$0xf]
    %v64 = vld [vmem:[#allocation5 + $0x14] sm:$0xf]
    %v65 = vld [vmem:[#allocation5 + $0x18] sm:$0xf]
    %v66 = vld [vmem:[#allocation5 + $0x1c] sm:$0xf]
    %v67 = vld [vmem:[#allocation5 + $0x20] sm:$0xf]
    %v68 = vld [vmem:[#allocation5 + $0x24] sm:$0xf]
    %v69 = vld [vmem:[#allocation5 + $0x28] sm:$0xf]
    %v70 = vld [vmem:[#allocation5 + $0x2c] sm:$0xf]
    %v71 = vld [vmem:[#allocation5 + $0x30] sm:$0xf]
    %v72 = vld [vmem:[#allocation5 + $0x34] sm:$0xf]
    %v73 = vld [vmem:[#allocation5 + $0x38] sm:$0xf]
    %v74 = vld [vmem:[#allocation5 + $0x3c] sm:$0xf]
    %v77 = vunpack.c.l.b16 %v57
    %v78 = vunpack.c.l.b16 %v58
    %v79 = vpack.c.b16 %v78, %v77
    %v97 = vunpack.c.l.b16 %v59
    %v98 = vunpack.c.l.b16 %v60
    %v99 = vunpack.c.l.b16 %v61
    %v100 = vunpack.c.l.b16 %v62
    %v101 = vunpack.c.l.b16 %v63
    %v102 = vunpack.c.l.b16 %v64
    %v103 = vunpack.c.l.b16 %v65
    %v104 = vunpack.c.l.b16 %v66
    %v105 = vunpack.c.l.b16 %v67
    %v106 = vunpack.c.l.b16 %v68
    %v107 = vunpack.c.l.b16 %v69
    %v108 = vunpack.c.l.b16 %v70
    %v109 = vunpack.c.l.b16 %v71
    %v110 = vunpack.c.l.b16 %v72
    %v111 = vunpack.c.l.b16 %v73
    %v112 = vunpack.c.l.b16 %v74
    %v113 = vpack.c.b16 %v98, %v97
    %v114 = vpack.c.b16 %v100, %v99
    %v115 = vpack.c.b16 %v102, %v101
    %v116 = vpack.c.b16 %v104, %v103
    %v117 = vpack.c.b16 %v106, %v105
    %v118 = vpack.c.b16 %v108, %v107
    %v119 = vpack.c.b16 %v110, %v109
    %v120 = vpack.c.b16 %v112, %v111
    %129 = vmatprep.subr.bf16.mxu0 0
    %130 = vmatpush1.bf16.msra.mxu0 %v113
    %131 = vmatprep.subr.bf16.mxu0 0
    %132 = vmatpush1.bf16.msra.mxu0 %v114
    %133 = vmatprep.subr.bf16.mxu0 0
    %134 = vmatpush1.bf16.msra.mxu0 %v115
    %135 = vmatprep.subr.bf16.mxu0 0
    %136 = vmatpush1.bf16.msra.mxu0 %v116
    %137 = vmatprep.subr.bf16.mxu0 0
    %138 = vmatpush1.bf16.msra.mxu0 %v117
    %139 = vmatprep.subr.bf16.mxu0 0
    %140 = vmatpush1.bf16.msra.mxu0 %v118
    %141 = vmatprep.subr.bf16.mxu0 0
    %142 = vmatpush1.bf16.msra.mxu0 %v119
    %143 = vmatprep.subr.bf16.mxu0 0
    %144 = vmatpush1.bf16.msra.mxu0 %v120
    %145 = vmatprep.subr.bf16.mxu0 0
    %146 = vmatpush1.bf16.msra.mxu0 0
    %147 = vmatprep.subr.bf16.mxu0 0
    %148 = vmatpush1.bf16.msra.mxu0 0
    %149 = vmatprep.subr.bf16.mxu0 0
    %150 = vmatpush1.bf16.msra.mxu0 0
    %151 = vmatprep.subr.bf16.mxu0 0
    %152 = vmatpush1.bf16.msra.mxu0 0
    %153 = vmatprep.subr.bf16.mxu0 0
    %154 = vmatpush1.bf16.msra.mxu0 0
    %155 = vmatprep.subr.bf16.mxu0 0
    %156 = vmatpush1.bf16.msra.mxu0 0
    %157 = vmatprep.subr.bf16.mxu0 0
    %158 = vmatpush1.bf16.msra.mxu0 0
    %159 = vmatprep.subr.bf16.mxu0 0
    %160 = vmatpush1.bf16.msra.mxu0 0
    %161 = vmatprep.mubr.bf16.mxu0 0
    %162 = vmatmul.mubr.bf16.gmra.mrb[0].mxu0 %v79
    %v163 = vpop.f32.mrb[0].mxu0
    %v164 = vadd.f32 0.0, %v163
    %v165 = vpop.f32.mrb[0].mxu0
    %v166 = vpop.f32.mrb[0].mxu0
    %v167 = vadd.f32 0.0, %v166
    %v168 = vpop.f32.mrb[0].mxu0
    %169 = vdwg.mxu0
    %v170 = vxor.u32 %v164, 2147483648
    %v171 = vxor.u32 %v167, 2147483648
    %v172 = vmul.f32 %v170, 1.442695
    %v173 = vpow.pop %v172
    %v174 = vmul.f32 %v171, 1.442695
    %v175 = vpow.pop %v174
    %v176 = vadd.f32 %v173, 1.0
    %v177 = vadd.f32 %v175, 1.0
    %v178 = vrcp.pop %v176
    %v179 = vmul.f32 1.0, %v178
    %v180 = vrcp.pop %v177
    %v181 = vmul.f32 1.0, %v180
    %v182 = vmul.f32 %v164, %v179
    %v183 = vmul.f32 %v167, %v181
    %v184 = vpack.c.bf16 %v183, %v182
    %v185 = vld [vmem:[#allocation7] sm:$0xf]
    %v186 = vld [vmem:[#allocation7 + $0x4] sm:$0xf]
    %v187 = vld [vmem:[#allocation7 + $0x8] sm:$0xf]
    %v188 = vld [vmem:[#allocation7 + $0xc] sm:$0xf]
    %v189 = vld [vmem:[#allocation7 + $0x10] sm:$0xf]
    %v190 = vld [vmem:[#allocation7 + $0x14] sm:$0xf]
    %v191 = vld [vmem:[#allocation7 + $0x18] sm:$0xf]
    %v192 = vld [vmem:[#allocation7 + $0x1c] sm:$0xf]
    %v193 = vld [vmem:[#allocation7 + $0x20] sm:$0xf]
    %v194 = vld [vmem:[#allocation7 + $0x24] sm:$0xf]
    %v195 = vld [vmem:[#allocation7 + $0x28] sm:$0xf]
    %v196 = vld [vmem:[#allocation7 + $0x2c] sm:$0xf]
    %v197 = vld [vmem:[#allocation7 + $0x30] sm:$0xf]
    %v198 = vld [vmem:[#allocation7 + $0x34] sm:$0xf]
    %v199 = vld [vmem:[#allocation7 + $0x38] sm:$0xf]
    %v200 = vld [vmem:[#allocation7 + $0x3c] sm:$0xf]
    %v217 = vunpack.c.l.b16 %v185
    %v218 = vunpack.c.l.b16 %v186
    %v219 = vunpack.c.l.b16 %v187
    %v220 = vunpack.c.l.b16 %v188
    %v221 = vunpack.c.l.b16 %v189
    %v222 = vunpack.c.l.b16 %v190
    %v223 = vunpack.c.l.b16 %v191
    %v224 = vunpack.c.l.b16 %v192
    %v225 = vunpack.c.l.b16 %v193
    %v226 = vunpack.c.l.b16 %v194
    %v227 = vunpack.c.l.b16 %v195
    %v228 = vunpack.c.l.b16 %v196
    %v229 = vunpack.c.l.b16 %v197
    %v230 = vunpack.c.l.b16 %v198
    %v231 = vunpack.c.l.b16 %v199
    %v232 = vunpack.c.l.b16 %v200
    %v233 = vpack.c.b16 %v218, %v217
    %v234 = vpack.c.b16 %v220, %v219
    %v235 = vpack.c.b16 %v222, %v221
    %v236 = vpack.c.b16 %v224, %v223
    %v237 = vpack.c.b16 %v226, %v225
    %v238 = vpack.c.b16 %v228, %v227
    %v239 = vpack.c.b16 %v230, %v229
    %v240 = vpack.c.b16 %v232, %v231
    %249 = vmatprep.subr.bf16.mxu0 0
    %250 = vmatpush1.bf16.msra.mxu0 %v233
    %251 = vmatprep.subr.bf16.mxu0 0
    %252 = vmatpush1.bf16.msra.mxu0 %v234
    %253 = vmatprep.subr.bf16.mxu0 0
    %254 = vmatpush1.bf16.msra.mxu0 %v235
    %255 = vmatprep.subr.bf16.mxu0 0
    %256 = vmatpush1.bf16.msra.mxu0 %v236
    %257 = vmatprep.subr.bf16.mxu0 0
    %258 = vmatpush1.bf16.msra.mxu0 %v237
    %259 = vmatprep.subr.bf16.mxu0 0
    %260 = vmatpush1.bf16.msra.mxu0 %v238
    %261 = vmatprep.subr.bf16.mxu0 0
    %262 = vmatpush1.bf16.msra.mxu0 %v239
    %263 = vmatprep.subr.bf16.mxu0 0
    %264 = vmatpush1.bf16.msra.mxu0 %v240
    %265 = vmatprep.subr.bf16.mxu0 0
    %266 = vmatpush1.bf16.msra.mxu0 0
    %267 = vmatprep.subr.bf16.mxu0 0
    %268 = vmatpush1.bf16.msra.mxu0 0
    %269 = vmatprep.subr.bf16.mxu0 0
    %270 = vmatpush1.bf16.msra.mxu0 0
    %271 = vmatprep.subr.bf16.mxu0 0
    %272 = vmatpush1.bf16.msra.mxu0 0
    %273 = vmatprep.subr.bf16.mxu0 0
    %274 = vmatpush1.bf16.msra.mxu0 0
    %275 = vmatprep.subr.bf16.mxu0 0
    %276 = vmatpush1.bf16.msra.mxu0 0
    %277 = vmatprep.subr.bf16.mxu0 0
    %278 = vmatpush1.bf16.msra.mxu0 0
    %279 = vmatprep.subr.bf16.mxu0 0
    %280 = vmatpush1.bf16.msra.mxu0 0
    %281 = vmatprep.mubr.bf16.mxu0 0
    %282 = vmatmul.mubr.bf16.gmra.mrb[0].mxu0 %v184
    %v283 = vpop.f32.mrb[0].mxu0
    %v284 = vadd.f32 0.0, %v283
    %v285 = vpop.f32.mrb[0].mxu0
    %v286 = vpop.f32.mrb[0].mxu0
    %v287 = vadd.f32 0.0, %v286
    %v288 = vpop.f32.mrb[0].mxu0
    %289 = vdwg.mxu0
    %v290 = vpack.c.bf16 %v287, %v284
    %v292 = vunpack.c.l.b16 %v290
    %v293 = vunpack.c.h.b16 %v290
    %v294 = vpack.c.b16 %v292, %v292
    %v295 = vpack.c.b16 %v293, %v293
    %298 = vst [vmem:[#allocation8] sm:$0xf] %v294
    %299 = vst [vmem:[#allocation8 + $0x4] sm:$0xf] %v295
    // Predicated region
    $region26: #{tpu_custom_call.1} parent=1 // pred_check
      _
    $region27: #{tpu_custom_call.1} parent=1 // pred_check_branch
      %301 = sbr.rel (0) target = $region29
    $region28: #{tpu_custom_call.1} parent=1 // pred_region
      %s303 = ssub.s32 128, 128
      %304 = vsyncadd [#allocation4], %s303
      %s305 = sshll.u32 [#allocation8], 4
      %s306 = int_to_ptr.vmem [resolvable:$true] %s305
      %311 = dma.vmem_to_hbm [thread:$0]  %s306, 128, %s3, [#allocation4], 64, 64, 4
    $region29: #{tpu_custom_call.1} parent=1 // pred_fallthru
      _
    // Predicated region
    $region30: #{tpu_custom_call.1} parent=1 // pred_check
      _
    $region31: #{tpu_custom_call.1} parent=1 // pred_check_branch
      %313 = sbr.rel (0) target = $region33
    $region32: #{tpu_custom_call.1} parent=1 // pred_region
      %314 = dma.done [#allocation4], 128
    $region33: #{tpu_custom_call.1} parent=1 // pred_fallthru
      _
    %315 = vsyncpa [#allocation3], 1
    %316 = vsyncpa [#allocation6], 1
    %317 = vsyncpa [#allocation4], 1

</llo_original>
